<compile_context>
chip_gen: v5e
topology: v5e:2x2
jax: 0.10.0
libtpu: 0.0.40
codegen_flags: <defaults>
</compile_context>

<pallas_src>
import numpy as np
import jax
import jax.numpy as jnp
from jax.experimental import pallas as pl
from jax.experimental.pallas import tpu as pltpu

# ---------------------------------------------------------------------------
# Model / layout constants
# ---------------------------------------------------------------------------
B = 2                      # batch
H = W = 16                 # input spatial
C0, C1, C2 = 3, 8, 16      # channels: input, conv1 out, conv2 out
K = 3                      # conv kernel size
H1 = W1 = 16               # conv1 output spatial (stride 1, pad 1)
H2 = W2 = 8                # conv2 output spatial (stride 2, pad 1)
F1 = 32                    # fc1 output features
LANES = 128

ROW_COLS = (W + 2) * C0    # 54  : one width-padded input row, (wp*C0 + ci)
ROW_PAD = 56               # lane-pad each input row block to a multiple of 8
K1 = 5 * ROW_PAD + 8       # 288 : conv1 GEMM K (5 input rows, +8 zero pad for
                           #       bf16 sublane alignment of the weight pack)
NCAT = K * W1 * C1         # 384 : 3 vertical conv2 taps of conv1 side by side
NW2 = W2 * C2              # 128 : conv2 output lanes (ow2*C2 + c2)
NFOLD = H2 * F1            # 256 : fc1 wide-dot lanes (oh2*F1 + n)


# ---------------------------------------------------------------------------
# Synthetic SelfDriveModel parameters (PyTorch layouts)
# ---------------------------------------------------------------------------
def init_params(key):
    ks = jax.random.split(key, 8)
    scale = 0.1
    return {
        "conv1_w": scale * jax.random.normal(ks[0], (C1, C0, K, K), jnp.float32),
        "conv1_b": scale * jax.random.normal(ks[1], (C1,), jnp.float32),
        "conv2_w": scale * jax.random.normal(ks[2], (C2, C1, K, K), jnp.float32),
        "conv2_b": scale * jax.random.normal(ks[3], (C2,), jnp.float32),
        "fc1_w": scale * jax.random.normal(ks[4], (C2 * H2 * W2, F1), jnp.float32),
        "fc1_b": scale * jax.random.normal(ks[5], (F1,), jnp.float32),
        "fc2_w": scale * jax.random.normal(ks[6], (F1, 1), jnp.float32),
        "fc2_b": scale * jax.random.normal(ks[7], (1,), jnp.float32),
    }


def prepare_params(params):
    """One-time folding of PyTorch-layout weights into kernel-friendly,
    lane-dense GEMM matrices, packed by lane width into 4 bf16 arrays."""
    w1 = np.asarray(params["conv1_w"], np.float32)   # (C1, C0, 3, 3)
    b1 = np.asarray(params["conv1_b"], np.float32)
    w2 = np.asarray(params["conv2_w"], np.float32)   # (C2, C1, 3, 3)
    b2 = np.asarray(params["conv2_b"], np.float32)
    fw1 = np.asarray(params["fc1_w"], np.float32)    # (C2*H2*W2, F1), NCHW flat
    fb1 = np.asarray(params["fc1_b"], np.float32)
    fw2 = np.asarray(params["fc2_w"], np.float32)    # (F1, 1)
    fb2 = np.asarray(params["fc2_b"], np.float32)

    # conv1 per vertical tap: m1[i][wp*C0+ci, ow*C1+co] = w1[co, ci, i, wp-ow]
    m1 = np.zeros((K, ROW_PAD, W1 * C1), np.float32)             # (3, 56, 128)
    for i in range(K):
        for j in range(K):
            blk = w1[:, :, i, j].T                               # (C0, C1)
            for ow in range(W1):
                wp = ow + j
                m1[i, wp * C0:(wp + 1) * C0, ow * C1:(ow + 1) * C1] = blk

    # conv1 "3 taps at once": slab column-block d holds padded input row
    # 2*oh2-1+d, output lane-block ki holds conv1 row 2*oh2+ki-1.
    m1cat = np.zeros((K1, NCAT), np.float32)                     # (288, 384)
    for d in range(5):
        for ki in range(K):
            i = d - ki
            if 0 <= i < K:
                m1cat[d * ROW_PAD:(d + 1) * ROW_PAD,
                      ki * 128:(ki + 1) * 128] = m1[i]
    b1cat = np.tile(np.tile(b1, W1), K)[None, :]                 # (1, 384)

    # vertical conv2 padding: only (oh2==0, ki==0) reads h1 row -1 -> zero it.
    rowmask = np.ones((H2 * B, NCAT), np.float32)                # (16, 384)
    rowmask[0:B, 0:W1 * C1] = 0.0

    # conv2 (stride 2): horizontal padding folded in as missing weight rows.
    # m2cat[ki*128 + ow1*C1 + c1, ow2*C2 + c2] = w2[c2, c1, ki, ow1-2*ow2+1]
    m2cat = np.zeros((NCAT, NW2), np.float32)                    # (384, 128)
    for ki in range(K):
        for ow2 in range(W2):
            for kj in range(K):
                ow1 = 2 * ow2 + kj - 1
                if 0 <= ow1 < W1:
                    m2cat[ki * 128 + ow1 * C1: ki * 128 + (ow1 + 1) * C1,
                          ow2 * C2:(ow2 + 1) * C2] = w2[:, :, ki, kj].T
    b2r = np.tile(b2, W2)[None, :]                               # (1, 128)

    # fc1: NCHW-flatten folded into per-oh2 weight blocks, laid out as one wide
    # (128, 8*32) matrix; block-diag mask + fold matrices do the row reduction.
    wblocks = fw1.reshape(C2, H2, W2, F1).transpose(1, 2, 0, 3)  # (oh2,ow2,c2,n)
    wblocks = wblocks.reshape(H2, NW2, F1)                       # (8, 128, 32)
    wstack = wblocks.transpose(1, 0, 2).reshape(NW2, NFOLD)      # (128, 256)
    rr = np.arange(H2 * B)[:, None]                              # row = oh2*B+b
    cc = np.arange(NFOLD)[None, :]                               # col = oh2'*F1+n
    fmask = ((rr // B) == (cc // F1)).astype(np.float32)         # (16, 256)
    asel = ((np.arange(H2 * B)[None, :] % B)
            == np.arange(B)[:, None]).astype(np.float32)         # (2, 16)
    cfold = np.tile(np.eye(F1, dtype=np.float32), (H2, 1))       # (256, 32)
    bfc1 = fb1[None, :]                                          # (1, 32)

    # fc2: pad the single output column + bias to 128 lanes (dense final store)
    wfc2 = np.zeros((F1, LANES), np.float32)
    wfc2[:, 0] = fw2[:, 0]
    bfc2 = np.zeros((1, LANES), np.float32)
    bfc2[0, 0] = fb2[0]

    # Pack constants by lane width -> 4 operands instead of 13 (fewer DMAs).
    # All slice offsets used in the kernel are multiples of 16 (bf16 sublanes).
    packA = np.concatenate([m1cat, rowmask, b1cat], axis=0)      # (305, 384)
    packB = np.concatenate([m2cat, wfc2, b2r, bfc2], axis=0)     # (418, 128)
    packC = np.concatenate([wstack, fmask], axis=0)              # (144, 256)
    aselp = np.zeros((B, F1), np.float32)
    aselp[:, :H2 * B] = asel
    packD = np.concatenate([cfold, aselp, bfc1], axis=0)         # (259, 32)

    packs = dict(packA=packA, packB=packB, packC=packC, packD=packD)
    return {k: jnp.asarray(v, jnp.bfloat16) for k, v in packs.items()}


# ---------------------------------------------------------------------------
# Fused Pallas kernel: conv1 -> conv2 -> flatten -> fc1 -> fc2, 6 dots total
# ---------------------------------------------------------------------------
def _fused_forward_kernel(x_ref, pa_ref, pb_ref, pc_ref, pd_ref, o_ref):
    f32 = jnp.float32
    bf16 = jnp.bfloat16

    # ---- conv1: 3 vertical conv2 taps of conv1, both images, one bf16 dot --
    m1cat = pa_ref[0:K1, :]                                      # (288, 384)
    h1 = jnp.dot(x_ref[...], m1cat, preferred_element_type=f32)  # (16, 384)
    rowmask = pa_ref[K1:K1 + H2 * B, :].astype(f32)              # (16, 384)
    b1cat = pa_ref[K1 + H2 * B:K1 + H2 * B + 1, :].astype(f32)   # (1, 384)
    h1 = jnp.maximum(h1 + b1cat, 0.0) * rowmask

    # ---- conv2 (stride 2; all padding folded into weights/mask), one dot ---
    m2cat = pb_ref[0:NCAT, :]                                    # (384, 128)
    tail_b = pb_ref[NCAT + F1:NCAT + F1 + 2, :].astype(f32)      # [b2r; bfc2]
    h2 = jnp.dot(h1.astype(bf16), m2cat,
                 preferred_element_type=f32)                     # (16, 128)
    h2 = jnp.maximum(h2 + tail_b[0:1, :], 0.0)                   # rows (oh2, b)

    # ---- fc1: flatten contraction = wide dot + block-diag mask + 2 folds ---
    wstack = pc_ref[0:NW2, :]                                    # (128, 256)
    fmask = pc_ref[NW2:NW2 + H2 * B, :].astype(f32)              # (16, 256)
    p = jnp.dot(h2.astype(bf16), wstack,
                preferred_element_type=f32) * fmask              # (16, 256)
    cfold = pd_ref[0:NFOLD, :].astype(f32)                       # (256, 32)
    taild = pd_ref[NFOLD:NFOLD + 3, :].astype(f32)               # [asel; bfc1]
    asel = taild[0:B, 0:H2 * B]                                  # (2, 16)
    bfc1 = taild[B:B + 1, :]                                     # (1, 32)
    h3 = jnp.dot(jnp.dot(asel, p, preferred_element_type=f32), cfold,
                 preferred_element_type=f32)                     # (2, 32)
    h3 = jnp.maximum(h3 + bfc1, 0.0)

    # ---- fc2 (single output column padded to 128 lanes, dense store) -------
    wfc2 = pb_ref[NCAT:NCAT + F1, :].astype(f32)                 # (32, 128)
    o_ref[...] = jnp.dot(h3, wfc2, preferred_element_type=f32) + tail_b[1:2, :]


@jax.jit
def gradcam_forward(fused_params, x_nchw):
    """GradCamModel.forward: returns (out, selected_out).

    selected_out is the output of `linear_layers` (the hooked module), which is
    also the model output."""
    assert x_nchw.shape[0] == B
    # Wrapper-side layout plumbing only (~18 KB slab): row-wise im2col so each
    # slab row (oh2, b) carries the 5 padded input rows conv2 output row oh2
    # needs; an extra zero row on top stands in for padded row index -1.
    x = jnp.transpose(x_nchw.astype(jnp.float32), (0, 2, 3, 1))    # (B,16,16,3)
    xp = jnp.pad(x, ((0, 0), (2, 1), (1, 1), (0, 0)))              # (B,19,18,3)
    rows = xp.reshape(B, H + 3, ROW_COLS)                          # (B,19,54)
    rows = jnp.pad(rows, ((0, 0), (0, 0), (0, ROW_PAD - ROW_COLS)))  # (B,19,56)
    slab = jnp.concatenate(
        [rows[:, d:d + 2 * H2:2, :] for d in range(5)], axis=-1)   # (B,8,280)
    x_slab = slab.transpose(1, 0, 2).reshape(H2 * B, 5 * ROW_PAD)  # (16,280)
    x_slab = jnp.pad(x_slab, ((0, 0), (0, K1 - 5 * ROW_PAD)))      # (16,288)
    x_slab = x_slab.astype(jnp.bfloat16)

    vmem = pl.BlockSpec(memory_space=pltpu.MemorySpace.VMEM)
    out_pad = pl.pallas_call(
        _fused_forward_kernel,
        out_shape=jax.ShapeDtypeStruct((B, LANES), jnp.float32),
        in_specs=[vmem] * 5,
        out_specs=vmem,
    )(x_slab, fused_params["packA"], fused_params["packB"],
      fused_params["packC"], fused_params["packD"])

    out = out_pad[:, :1]                                           # (B, 1)
    selected_out = out   # forward hook on linear_layers captures its output
    return out, selected_out


# ---------------------------------------------------------------------------
# Pure-XLA reference (same synthetic model, f32 HIGHEST) for correctness check
# ---------------------------------------------------------------------------
def reference_forward(params, x_nchw):
    p = params
    hi = jax.lax.Precision.HIGHEST
    h = jax.lax.conv_general_dilated(
        x_nchw.astype(jnp.float32), p["conv1_w"], (1, 1), ((1, 1), (1, 1)),
        dimension_numbers=("NCHW", "OIHW", "NCHW"), precision=hi)
    h = jax.nn.relu(h + p["conv1_b"][None, :, None, None])
    h = jax.lax.conv_general_dilated(
        h, p["conv2_w"], (2, 2), ((1, 1), (1, 1)),
        dimension_numbers=("NCHW", "OIHW", "NCHW"), precision=hi)
    h = jax.nn.relu(h + p["conv2_b"][None, :, None, None])
    h = h.reshape(h.shape[0], -1)                                 # NCHW flatten
    h = jax.nn.relu(jnp.dot(h, p["fc1_w"], precision=hi) + p["fc1_b"])
    return jnp.dot(h, p["fc2_w"], precision=hi) + p["fc2_b"]


if __name__ == "__main__":
    key = jax.random.PRNGKey(0)
    pkey, xkey = jax.random.split(key)
    params = init_params(pkey)
    fused = prepare_params(params)          # all layout transforms done once
    x = jax.random.normal(xkey, (B, C0, H, W), jnp.float32)

    out, selected_out = gradcam_forward(fused, x)
    jax.block_until_ready(out)
    jax.block_until_ready(selected_out)

    assert out.shape == (B, 1) and out.dtype == jnp.float32
    assert selected_out.shape == (B, 1)

    ref = reference_forward(params, x)
    # Tolerance sized for bf16 MXU inputs vs. an f32 HIGHEST-precision
    # reference; a structural/indexing bug would be off by O(0.1-1).
    assert jnp.allclose(out, ref, atol=3e-2, rtol=3e-2), (out, ref)

    print("KERNEL_OK")
</pallas_src>

<mosaic_0001>
module attributes {stable_mosaic.version = 11 : i64} {
  func.func @_fused_forward_kernel(%arg0: memref<16x288xbf16, #tpu.memory_space<vmem>>, %arg1: memref<305x384xbf16, #tpu.memory_space<vmem>>, %arg2: memref<418x128xbf16, #tpu.memory_space<vmem>>, %arg3: memref<144x256xbf16, #tpu.memory_space<vmem>>, %arg4: memref<259x32xbf16, #tpu.memory_space<vmem>>, %arg5: memref<2x128xf32, #tpu.memory_space<vmem>>) attributes {dimension_semantics = [], scalar_prefetch = 0 : i64, scratch_operands = 0 : i64, tpu.core_type = #tpu.core_type<tc>} {
    %c0 = arith.constant 0 : index
    %c0_0 = arith.constant 0 : index
    %0 = vector.load %arg1[%c0, %c0_0] : memref<305x384xbf16, #tpu.memory_space<vmem>>, vector<288x384xbf16>
    %c0_1 = arith.constant 0 : index
    %c0_2 = arith.constant 0 : index
    %1 = vector.load %arg0[%c0_1, %c0_2] : memref<16x288xbf16, #tpu.memory_space<vmem>>, vector<16x288xbf16>
    %cst = arith.constant dense<0.000000e+00> : vector<16x384xf32>
    %2 = tpu.matmul %1, %0, %cst {dimension_numbers = #tpu.dot_dimension_numbers<[1], [0], [0], [1], [0, 0, 1, 1], [], []>} : vector<16x288xbf16>, vector<288x384xbf16>, vector<16x384xf32> -> vector<16x384xf32>
    %c288 = arith.constant 288 : index
    %c0_3 = arith.constant 0 : index
    %3 = vector.load %arg1[%c288, %c0_3] : memref<305x384xbf16, #tpu.memory_space<vmem>>, vector<16x384xbf16>
    %4 = arith.extf %3 : vector<16x384xbf16> to vector<16x384xf32>
    %c304 = arith.constant 304 : index
    %c0_4 = arith.constant 0 : index
    %5 = vector.load %arg1[%c304, %c0_4] : memref<305x384xbf16, #tpu.memory_space<vmem>>, vector<1x384xbf16>
    %6 = arith.extf %5 : vector<1x384xbf16> to vector<1x384xf32>
    %7 = vector.broadcast %6 : vector<1x384xf32> to vector<16x384xf32>
    %8 = arith.addf %2, %7 : vector<16x384xf32>
    %cst_5 = arith.constant 0.000000e+00 : f32
    %9 = vector.broadcast %cst_5 : f32 to vector<16x384xf32>
    %10 = arith.maximumf %8, %9 : vector<16x384xf32>
    %11 = arith.mulf %10, %4 : vector<16x384xf32>
    %c0_6 = arith.constant 0 : index
    %c0_7 = arith.constant 0 : index
    %12 = vector.load %arg2[%c0_6, %c0_7] : memref<418x128xbf16, #tpu.memory_space<vmem>>, vector<384x128xbf16>
    %c416 = arith.constant 416 : index
    %c0_8 = arith.constant 0 : index
    %13 = vector.load %arg2[%c416, %c0_8] : memref<418x128xbf16, #tpu.memory_space<vmem>>, vector<2x128xbf16>
    %14 = arith.extf %13 : vector<2x128xbf16> to vector<2x128xf32>
    %15 = arith.truncf %11 : vector<16x384xf32> to vector<16x384xbf16>
    %cst_9 = arith.constant dense<0.000000e+00> : vector<16x128xf32>
    %16 = tpu.matmul %15, %12, %cst_9 {dimension_numbers = #tpu.dot_dimension_numbers<[1], [0], [0], [1], [0, 0, 1, 1], [], []>} : vector<16x384xbf16>, vector<384x128xbf16>, vector<16x128xf32> -> vector<16x128xf32>
    %17 = vector.extract_strided_slice %14 {offsets = [0, 0], sizes = [1, 128], strides = [1, 1]} : vector<2x128xf32> to vector<1x128xf32>
    %18 = vector.broadcast %17 : vector<1x128xf32> to vector<16x128xf32>
    %19 = arith.addf %16, %18 : vector<16x128xf32>
    %cst_10 = arith.constant 0.000000e+00 : f32
    %20 = vector.broadcast %cst_10 : f32 to vector<16x128xf32>
    %21 = arith.maximumf %19, %20 : vector<16x128xf32>
    %c0_11 = arith.constant 0 : index
    %c0_12 = arith.constant 0 : index
    %22 = vector.load %arg3[%c0_11, %c0_12] : memref<144x256xbf16, #tpu.memory_space<vmem>>, vector<128x256xbf16>
    %c128 = arith.constant 128 : index
    %c0_13 = arith.constant 0 : index
    %23 = vector.load %arg3[%c128, %c0_13] : memref<144x256xbf16, #tpu.memory_space<vmem>>, vector<16x256xbf16>
    %24 = arith.extf %23 : vector<16x256xbf16> to vector<16x256xf32>
    %25 = arith.truncf %21 : vector<16x128xf32> to vector<16x128xbf16>
    %cst_14 = arith.constant dense<0.000000e+00> : vector<16x256xf32>
    %26 = tpu.matmul %25, %22, %cst_14 {dimension_numbers = #tpu.dot_dimension_numbers<[1], [0], [0], [1], [0, 0, 1, 1], [], []>} : vector<16x128xbf16>, vector<128x256xbf16>, vector<16x256xf32> -> vector<16x256xf32>
    %27 = arith.mulf %26, %24 : vector<16x256xf32>
    %c0_15 = arith.constant 0 : index
    %c0_16 = arith.constant 0 : index
    %28 = vector.load %arg4[%c0_15, %c0_16] : memref<259x32xbf16, #tpu.memory_space<vmem>>, vector<256x32xbf16>
    %29 = arith.extf %28 : vector<256x32xbf16> to vector<256x32xf32>
    %c256 = arith.constant 256 : index
    %c0_17 = arith.constant 0 : index
    %30 = vector.load %arg4[%c256, %c0_17] : memref<259x32xbf16, #tpu.memory_space<vmem>>, vector<3x32xbf16>
    %31 = arith.extf %30 : vector<3x32xbf16> to vector<3x32xf32>
    %32 = vector.extract_strided_slice %31 {offsets = [0, 0], sizes = [2, 16], strides = [1, 1]} : vector<3x32xf32> to vector<2x16xf32>
    %33 = vector.extract_strided_slice %31 {offsets = [2, 0], sizes = [1, 32], strides = [1, 1]} : vector<3x32xf32> to vector<1x32xf32>
    %cst_18 = arith.constant dense<0.000000e+00> : vector<2x256xf32>
    %34 = tpu.matmul %32, %27, %cst_18 {dimension_numbers = #tpu.dot_dimension_numbers<[1], [0], [0], [1], [0, 0, 1, 1], [], []>} : vector<2x16xf32>, vector<16x256xf32>, vector<2x256xf32> -> vector<2x256xf32>
    %cst_19 = arith.constant dense<0.000000e+00> : vector<2x32xf32>
    %35 = tpu.matmul %34, %29, %cst_19 {dimension_numbers = #tpu.dot_dimension_numbers<[1], [0], [0], [1], [0, 0, 1, 1], [], []>} : vector<2x256xf32>, vector<256x32xf32>, vector<2x32xf32> -> vector<2x32xf32>
    %36 = vector.broadcast %33 : vector<1x32xf32> to vector<2x32xf32>
    %37 = arith.addf %35, %36 : vector<2x32xf32>
    %cst_20 = arith.constant 0.000000e+00 : f32
    %38 = vector.broadcast %cst_20 : f32 to vector<2x32xf32>
    %39 = arith.maximumf %37, %38 : vector<2x32xf32>
    %c384 = arith.constant 384 : index
    %c0_21 = arith.constant 0 : index
    %40 = vector.load %arg2[%c384, %c0_21] : memref<418x128xbf16, #tpu.memory_space<vmem>>, vector<32x128xbf16>
    %41 = arith.extf %40 : vector<32x128xbf16> to vector<32x128xf32>
    %cst_22 = arith.constant dense<0.000000e+00> : vector<2x128xf32>
    %42 = tpu.matmul %39, %41, %cst_22 {dimension_numbers = #tpu.dot_dimension_numbers<[1], [0], [0], [1], [0, 0, 1, 1], [], []>} : vector<2x32xf32>, vector<32x128xf32>, vector<2x128xf32> -> vector<2x128xf32>
    %43 = vector.extract_strided_slice %14 {offsets = [1, 0], sizes = [1, 128], strides = [1, 1]} : vector<2x128xf32> to vector<1x128xf32>
    %44 = vector.broadcast %43 : vector<1x128xf32> to vector<2x128xf32>
    %45 = arith.addf %42, %44 : vector<2x128xf32>
    %c0_23 = arith.constant 0 : index
    %c0_24 = arith.constant 0 : index
    %46 = vector.load %arg5[%c0_23, %c0_24] : memref<2x128xf32, #tpu.memory_space<vmem>>, vector<2x128xf32>
    tpu.vector_store %arg5[%c0_23, %c0_24], %45 {strides = array<i32>} : memref<2x128xf32, #tpu.memory_space<vmem>>, vector<2x128xf32>,
    return
  }
}

</mosaic_0001>

<llo_original>
// kernel: gradcam_forward.1
$region0: #{gradcam_forward.1}
  #allocation0 [shape = 'u32[]', space=smem, size = 0x4, offset = 0x4, fixed_abs, tag = 'smem constant byte address 0x4 - core index']
  #allocation1 [shape = 'u32[72,128]{1,0:T(1,128)}', space=vmem, size = 0x9000, scoped, tag = 'internal scratch']
  %s0 = inlined_call_operand.vmem [shape: bf16[16,288], index: 0, kind: input, shape index: {}]
  %s1 = inlined_call_operand.vmem [shape: bf16[305,384], index: 1, kind: input, shape index: {}]
  %s2 = inlined_call_operand.vmem [shape: bf16[418,128], index: 2, kind: input, shape index: {}]
  %s3 = inlined_call_operand.vmem [shape: bf16[144,256], index: 3, kind: input, shape index: {}]
  %s4 = inlined_call_operand.vmem [shape: bf16[259,32], index: 4, kind: input, shape index: {}]
  %s5 = inlined_call_operand.vmem [shape: f32[2,128], index: 5, kind: output, shape index: {}]
  %s6 = sld [smem:[#allocation0]]
  $region30: #{gradcam_forward.1} parent=0
    _
  %s8 = ssub.s32 1, %s6
  %s9 = scalar_select 0, %s8, %s6
  // Predicated region
  $region2: #{gradcam_forward.1} parent=0 // pred_check
    _
  $region3: #{gradcam_forward.1} parent=0 // pred_check_branch
    %11 = sbr.rel (0) target = $region5
  $region4: #{gradcam_forward.1} parent=0 // pred_region
    _
  $region5: #{gradcam_forward.1} parent=0 // pred_fallthru
    _
  // Predicated region
  $region6: #{gradcam_forward.1} parent=0 // pred_check
    _
  $region7: #{gradcam_forward.1} parent=0 // pred_check_branch
    %13 = sbr.rel (0) target = $region9
  $region8: #{gradcam_forward.1} parent=0 // pred_region
    _
  $region9: #{gradcam_forward.1} parent=0 // pred_fallthru
    _
  // Predicated region
  $region10: #{gradcam_forward.1} parent=0 // pred_check
    _
  $region11: #{gradcam_forward.1} parent=0 // pred_check_branch
    %15 = sbr.rel (0) target = $region13
  $region12: #{gradcam_forward.1} parent=0 // pred_region
    _
  $region13: #{gradcam_forward.1} parent=0 // pred_fallthru
    _
  // Predicated region
  $region14: #{gradcam_forward.1} parent=0 // pred_check
    _
  $region15: #{gradcam_forward.1} parent=0 // pred_check_branch
    %17 = sbr.rel (0) target = $region17
  $region16: #{gradcam_forward.1} parent=0 // pred_region
    _
  $region17: #{gradcam_forward.1} parent=0 // pred_fallthru
    _
  // Predicated region
  $region18: #{gradcam_forward.1} parent=0 // pred_check
    _
  $region19: #{gradcam_forward.1} parent=0 // pred_check_branch
    %19 = sbr.rel (0) target = $region21
  $region20: #{gradcam_forward.1} parent=0 // pred_region
    _
  $region21: #{gradcam_forward.1} parent=0 // pred_fallthru
    _
  %v21 = vld [vmem:[%s1] sm:$0xff]
  %v22 = vld [vmem:[%s1 + $0x8] sm:$0xf]
  %v23 = vld [vmem:[%s1 + $0xc] sm:$0xff]
  %v24 = vld [vmem:[%s1 + $0x14] sm:$0xf]
  %v25 = vld [vmem:[%s1 + $0x18] sm:$0xff]
  %v26 = vld [vmem:[%s1 + $0x20] sm:$0xf]
  %v27 = vld [vmem:[%s1 + $0x24] sm:$0xff]
  %v28 = vld [vmem:[%s1 + $0x2c] sm:$0xf]
  %v29 = vld [vmem:[%s1 + $0x30] sm:$0xff]
  %v30 = vld [vmem:[%s1 + $0x38] sm:$0xf]
  %v31 = vld [vmem:[%s1 + $0x3c] sm:$0xff]
  %v32 = vld [vmem:[%s1 + $0x44] sm:$0xf]
  %v33 = vld [vmem:[%s1 + $0x48] sm:$0xff]
  %v34 = vld [vmem:[%s1 + $0x50] sm:$0xf]
  %v35 = vld [vmem:[%s1 + $0x54] sm:$0xff]
  %v36 = vld [vmem:[%s1 + $0x5c] sm:$0xf]
  %v37 = vld [vmem:[%s1 + $0x60] sm:$0xff]
  %v38 = vld [vmem:[%s1 + $0x68] sm:$0xf]
  %v39 = vld [vmem:[%s1 + $0x6c] sm:$0xff]
  %v40 = vld [vmem:[%s1 + $0x74] sm:$0xf]
  %v41 = vld [vmem:[%s1 + $0x78] sm:$0xff]
  %v42 = vld [vmem:[%s1 + $0x80] sm:$0xf]
  %v43 = vld [vmem:[%s1 + $0x84] sm:$0xff]
  %v44 = vld [vmem:[%s1 + $0x8c] sm:$0xf]
  %v45 = vld [vmem:[%s1 + $0x90] sm:$0xff]
  %v46 = vld [vmem:[%s1 + $0x98] sm:$0xf]
  %v47 = vld [vmem:[%s1 + $0x9c] sm:$0xff]
  %v48 = vld [vmem:[%s1 + $0xa4] sm:$0xf]
  %v49 = vld [vmem:[%s1 + $0xa8] sm:$0xff]
  %v50 = vld [vmem:[%s1 + $0xb0] sm:$0xf]
  %v51 = vld [vmem:[%s1 + $0xb4] sm:$0xff]
  %v52 = vld [vmem:[%s1 + $0xbc] sm:$0xf]
  %v53 = vld [vmem:[%s1 + $0xc0] sm:$0xff]
  %v54 = vld [vmem:[%s1 + $0xc8] sm:$0xf]
  %v55 = vld [vmem:[%s1 + $0xcc] sm:$0xff]
  %v56 = vld [vmem:[%s1 + $0xd4] sm:$0xf]
  %v57 = vld [vmem:[%s1 + $0xd8] sm:$0xff]
  %v58 = vld [vmem:[%s1 + $0xe0] sm:$0xf]
  %v59 = vld [vmem:[%s1 + $0xe4] sm:$0xff]
  %v60 = vld [vmem:[%s1 + $0xec] sm:$0xf]
  %v61 = vld [vmem:[%s1 + $0xf0] sm:$0xff]
  %v62 = vld [vmem:[%s1 + $0xf8] sm:$0xf]
  %v63 = vld [vmem:[%s1 + $0xfc] sm:$0xff]
  %v64 = vld [vmem:[%s1 + $0x104] sm:$0xf]
  %v65 = vld [vmem:[%s1 + $0x108] sm:$0xff]
  %v66 = vld [vmem:[%s1 + $0x110] sm:$0xf]
  %v67 = vld [vmem:[%s1 + $0x114] sm:$0xff]
  %v68 = vld [vmem:[%s1 + $0x11c] sm:$0xf]
  %v69 = vld [vmem:[%s1 + $0x120] sm:$0xff]
  %v70 = vld [vmem:[%s1 + $0x128] sm:$0xf]
  %v71 = vld [vmem:[%s1 + $0x12c] sm:$0xff]
  %v72 = vld [vmem:[%s1 + $0x134] sm:$0xf]
  %v73 = vld [vmem:[%s1 + $0x138] sm:$0xff]
  %v74 = vld [vmem:[%s1 + $0x140] sm:$0xf]
  %v75 = vld [vmem:[%s1 + $0x144] sm:$0xff]
  %v76 = vld [vmem:[%s1 + $0x14c] sm:$0xf]
  %v77 = vld [vmem:[%s1 + $0x150] sm:$0xff]
  %v78 = vld [vmem:[%s1 + $0x158] sm:$0xf]
  %v79 = vld [vmem:[%s1 + $0x15c] sm:$0xff]
  %v80 = vld [vmem:[%s1 + $0x164] sm:$0xf]
  %v81 = vld [vmem:[%s1 + $0x168] sm:$0xff]
  %v82 = vld [vmem:[%s1 + $0x170] sm:$0xf]
  %v83 = vld [vmem:[%s1 + $0x174] sm:$0xff]
  %v84 = vld [vmem:[%s1 + $0x17c] sm:$0xf]
  %v85 = vld [vmem:[%s1 + $0x180] sm:$0xff]
  %v86 = vld [vmem:[%s1 + $0x188] sm:$0xf]
  %v87 = vld [vmem:[%s1 + $0x18c] sm:$0xff]
  %v88 = vld [vmem:[%s1 + $0x194] sm:$0xf]
  %v89 = vld [vmem:[%s1 + $0x198] sm:$0xff]
  %v90 = vld [vmem:[%s1 + $0x1a0] sm:$0xf]
  %v91 = vld [vmem:[%s1 + $0x1a4] sm:$0xff]
  %v92 = vld [vmem:[%s1 + $0x1ac] sm:$0xf]
  %v93 = vld [vmem:[%s0] sm:$0xff]
  %v94 = vld [vmem:[%s0 + $0x8] sm:$0xf]
  %v95 = vld [vmem:[%s0 + $0xc] sm:$0xff]
  %v96 = vld [vmem:[%s0 + $0x14] sm:$0xf]
  %v97 = vld [vmem:[%s1 + $0x1b0] sm:$0xff]
  %v98 = vld [vmem:[%s1 + $0x1b8] sm:$0xf]
  %v99 = vld [vmem:[%s1 + $0x1bc] sm:$0xff]
  %v100 = vld [vmem:[%s1 + $0x1c4] sm:$0xf]
  %v101 = vunpack.c.l.bf16 %v97
  %v102 = vunpack.c.h.bf16 %v97
  %v103 = vunpack.c.l.bf16 %v98
  %v104 = vunpack.c.l.bf16 %v99
  %v105 = vunpack.c.h.bf16 %v99
  %v106 = vunpack.c.l.bf16 %v100
  %v107 = vld [vmem:[%s1 + $0x1c8] sm:$0x11]
  %v108 = vld [vmem:[%s1 + $0x1d0] sm:$0x1]
  %v109 = vunpack.c.l.bf16 %v107
  %v110 = vunpack.c.h.bf16 %v107
  %v111 = vunpack.c.l.bf16 %v108
  %v112 = vperm.slane %v109, 0
  %v113 = vperm.slane %v110, 0
  %v114 = vperm.slane %v111, 0
  %v119 = vunpack.c.l.b16 %v93
  %v120 = vunpack.c.h.b16 %v93
  %v121 = vunpack.c.l.b16 %v94
  %v122 = vunpack.c.l.b16 %v95
  %v123 = vunpack.c.h.b16 %v95
  %v124 = vunpack.c.l.b16 %v96
  %v125 = vpack.c.b16 %v122, %v119
  %v126 = vpack.c.b16 %v123, %v120
  %v127 = vpack.c.b16 %v124, %v121
  %v202 = vunpack.c.l.b16 %v21
  %v203 = vunpack.c.h.b16 %v21
  %v204 = vunpack.c.l.b16 %v22
  %v205 = vunpack.c.l.b16 %v23
  %v206 = vunpack.c.h.b16 %v23
  %v207 = vunpack.c.l.b16 %v24
  %v208 = vunpack.c.l.b16 %v25
  %v209 = vunpack.c.h.b16 %v25
  %v210 = vunpack.c.l.b16 %v26
  %v211 = vunpack.c.l.b16 %v27
  %v212 = vunpack.c.h.b16 %v27
  %v213 = vunpack.c.l.b16 %v28
  %v214 = vunpack.c.l.b16 %v29
  %v215 = vunpack.c.h.b16 %v29
  %v216 = vunpack.c.l.b16 %v30
  %v217 = vunpack.c.l.b16 %v31
  %v218 = vunpack.c.h.b16 %v31
  %v219 = vunpack.c.l.b16 %v32
  %v220 = vunpack.c.l.b16 %v33
  %v221 = vunpack.c.h.b16 %v33
  %v222 = vunpack.c.l.b16 %v34
  %v223 = vunpack.c.l.b16 %v35
  %v224 = vunpack.c.h.b16 %v35
  %v225 = vunpack.c.l.b16 %v36
  %v226 = vunpack.c.l.b16 %v37
  %v227 = vunpack.c.h.b16 %v37
  %v228 = vunpack.c.l.b16 %v38
  %v229 = vunpack.c.l.b16 %v39
  %v230 = vunpack.c.h.b16 %v39
  %v231 = vunpack.c.l.b16 %v40
  %v232 = vunpack.c.l.b16 %v41
  %v233 = vunpack.c.h.b16 %v41
  %v234 = vunpack.c.l.b16 %v42
  %v235 = vunpack.c.l.b16 %v43
  %v236 = vunpack.c.h.b16 %v43
  %v237 = vunpack.c.l.b16 %v44
  %v238 = vunpack.c.l.b16 %v45
  %v239 = vunpack.c.h.b16 %v45
  %v240 = vunpack.c.l.b16 %v46
  %v241 = vunpack.c.l.b16 %v47
  %v242 = vunpack.c.h.b16 %v47
  %v243 = vunpack.c.l.b16 %v48
  %v244 = vunpack.c.l.b16 %v49
  %v245 = vunpack.c.h.b16 %v49
  %v246 = vunpack.c.l.b16 %v50
  %v247 = vunpack.c.l.b16 %v51
  %v248 = vunpack.c.h.b16 %v51
  %v249 = vunpack.c.l.b16 %v52
  %v250 = vunpack.c.l.b16 %v53
  %v251 = vunpack.c.h.b16 %v53
  %v252 = vunpack.c.l.b16 %v54
  %v253 = vunpack.c.l.b16 %v55
  %v254 = vunpack.c.h.b16 %v55
  %v255 = vunpack.c.l.b16 %v56
  %v256 = vunpack.c.l.b16 %v57
  %v257 = vunpack.c.h.b16 %v57
  %v258 = vunpack.c.l.b16 %v58
  %v259 = vunpack.c.l.b16 %v59
  %v260 = vunpack.c.h.b16 %v59
  %v261 = vunpack.c.l.b16 %v60
  %v262 = vunpack.c.l.b16 %v61
  %v263 = vunpack.c.h.b16 %v61
  %v264 = vunpack.c.l.b16 %v62
  %v265 = vunpack.c.l.b16 %v63
  %v266 = vunpack.c.h.b16 %v63
  %v267 = vunpack.c.l.b16 %v64
  %v268 = vunpack.c.l.b16 %v65
  %v269 = vunpack.c.h.b16 %v65
  %v270 = vunpack.c.l.b16 %v66
  %v271 = vunpack.c.l.b16 %v67
  %v272 = vunpack.c.h.b16 %v67
  %v273 = vunpack.c.l.b16 %v68
  %v274 = vunpack.c.l.b16 %v69
  %v275 = vunpack.c.h.b16 %v69
  %v276 = vunpack.c.l.b16 %v70
  %v277 = vunpack.c.l.b16 %v71
  %v278 = vunpack.c.h.b16 %v71
  %v279 = vunpack.c.l.b16 %v72
  %v280 = vunpack.c.l.b16 %v73
  %v281 = vunpack.c.h.b16 %v73
  %v282 = vunpack.c.l.b16 %v74
  %v283 = vunpack.c.l.b16 %v75
  %v284 = vunpack.c.h.b16 %v75
  %v285 = vunpack.c.l.b16 %v76
  %v286 = vunpack.c.l.b16 %v77
  %v287 = vunpack.c.h.b16 %v77
  %v288 = vunpack.c.l.b16 %v78
  %v289 = vunpack.c.l.b16 %v79
  %v290 = vunpack.c.h.b16 %v79
  %v291 = vunpack.c.l.b16 %v80
  %v292 = vunpack.c.l.b16 %v81
  %v293 = vunpack.c.h.b16 %v81
  %v294 = vunpack.c.l.b16 %v82
  %v295 = vunpack.c.l.b16 %v83
  %v296 = vunpack.c.h.b16 %v83
  %v297 = vunpack.c.l.b16 %v84
  %v298 = vunpack.c.l.b16 %v85
  %v299 = vunpack.c.h.b16 %v85
  %v300 = vunpack.c.l.b16 %v86
  %v301 = vunpack.c.l.b16 %v87
  %v302 = vunpack.c.h.b16 %v87
  %v303 = vunpack.c.l.b16 %v88
  %v304 = vunpack.c.l.b16 %v89
  %v305 = vunpack.c.h.b16 %v89
  %v306 = vunpack.c.l.b16 %v90
  %v307 = vunpack.c.l.b16 %v91
  %v308 = vunpack.c.h.b16 %v91
  %v309 = vunpack.c.l.b16 %v92
  %v310 = vpack.c.b16 %v205, %v202
  %v311 = vpack.c.b16 %v206, %v203
  %v312 = vpack.c.b16 %v207, %v204
  %v313 = vpack.c.b16 %v211, %v208
  %v314 = vpack.c.b16 %v212, %v209
  %v315 = vpack.c.b16 %v213, %v210
  %v316 = vpack.c.b16 %v217, %v214
  %v317 = vpack.c.b16 %v218, %v215
  %v318 = vpack.c.b16 %v219, %v216
  %v319 = vpack.c.b16 %v223, %v220
  %v320 = vpack.c.b16 %v224, %v221
  %v321 = vpack.c.b16 %v225, %v222
  %v322 = vpack.c.b16 %v229, %v226
  %v323 = vpack.c.b16 %v230, %v227
  %v324 = vpack.c.b16 %v231, %v228
  %v325 = vpack.c.b16 %v235, %v232
  %v326 = vpack.c.b16 %v236, %v233
  %v327 = vpack.c.b16 %v237, %v234
  %v328 = vpack.c.b16 %v241, %v238
  %v329 = vpack.c.b16 %v242, %v239
  %v330 = vpack.c.b16 %v243, %v240
  %v331 = vpack.c.b16 %v247, %v244
  %v332 = vpack.c.b16 %v248, %v245
  %v333 = vpack.c.b16 %v249, %v246
  %v334 = vpack.c.b16 %v253, %v250
  %v335 = vpack.c.b16 %v254, %v251
  %v336 = vpack.c.b16 %v255, %v252
  %v337 = vpack.c.b16 %v259, %v256
  %v338 = vpack.c.b16 %v260, %v257
  %v339 = vpack.c.b16 %v261, %v258
  %v340 = vpack.c.b16 %v265, %v262
  %v341 = vpack.c.b16 %v266, %v263
  %v342 = vpack.c.b16 %v267, %v264
  %v343 = vpack.c.b16 %v271, %v268
  %v344 = vpack.c.b16 %v272, %v269
  %v345 = vpack.c.b16 %v273, %v270
  %v346 = vpack.c.b16 %v277, %v274
  %v347 = vpack.c.b16 %v278, %v275
  %v348 = vpack.c.b16 %v279, %v276
  %v349 = vpack.c.b16 %v283, %v280
  %v350 = vpack.c.b16 %v284, %v281
  %v351 = vpack.c.b16 %v285, %v282
  %v352 = vpack.c.b16 %v289, %v286
  %v353 = vpack.c.b16 %v290, %v287
  %v354 = vpack.c.b16 %v291, %v288
  %v355 = vpack.c.b16 %v295, %v292
  %v356 = vpack.c.b16 %v296, %v293
  %v357 = vpack.c.b16 %v297, %v294
  %v358 = vpack.c.b16 %v301, %v298
  %v359 = vpack.c.b16 %v302, %v299
  %v360 = vpack.c.b16 %v303, %v300
  %v361 = vpack.c.b16 %v307, %v304
  %v362 = vpack.c.b16 %v308, %v305
  %v363 = vpack.c.b16 %v309, %v306
  %vm418 = vcmask 261120
  %v420 = vsel %vm418, %v127, 0
  %422 = vmatpush.bf16.msra.mxu0 %v331
  %423 = vmatpush.bf16.msra.mxu0 %v328
  %424 = vmatpush.bf16.msra.mxu0 %v325
  %425 = vmatpush.bf16.msra.mxu0 %v322
  %426 = vmatpush.bf16.msra.mxu0 %v319
  %427 = vmatpush.bf16.msra.mxu0 %v316
  %428 = vmatpush.bf16.msra.mxu0 %v313
  %429 = vmatpush.bf16.msra.mxu0 %v310
  %430 = vmatmul.bf16.gmra.mxu0 %v125
  %v431 = vpop.f32.mrf.mxu0
  %v432 = vadd.f32 %v112, %v431
  %v433 = vpop.f32.mrf.mxu0
  %v434 = vadd.f32 %v112, %v433
  %435 = vdwg.mxu0
  %436 = vmatpush.bf16.msra.mxu0 %v355
  %437 = vmatpush.bf16.msra.mxu0 %v352
  %438 = vmatpush.bf16.msra.mxu0 %v349
  %439 = vmatpush.bf16.msra.mxu0 %v346
  %440 = vmatpush.bf16.msra.mxu0 %v343
  %441 = vmatpush.bf16.msra.mxu0 %v340
  %442 = vmatpush.bf16.msra.mxu0 %v337
  %443 = vmatpush.bf16.msra.mxu0 %v334
  %444 = vmatmul.bf16.gmra.mxu0 %v126
  %v445 = vpop.f32.mrf.mxu0
  %v446 = vadd.f32 %v432, %v445
  %v447 = vpop.f32.mrf.mxu0
  %v448 = vadd.f32 %v434, %v447
  %449 = vdwg.mxu0
  %450 = vmatpush.bf16.msra.mxu0 0
  %451 = vmatpush.bf16.msra.mxu0 0
  %452 = vmatpush.bf16.msra.mxu0 0
  %453 = vmatpush.bf16.msra.mxu0 0
  %454 = vmatpush.bf16.msra.mxu0 0
  %455 = vmatpush.bf16.msra.mxu0 0
  %456 = vmatpush.bf16.msra.mxu0 %v361
  %457 = vmatpush.bf16.msra.mxu0 %v358
  %458 = vmatmul.bf16.gmra.mxu0 %v420
  %v459 = vpop.f32.mrf.mxu0
  %v460 = vadd.f32 %v446, %v459
  %v461 = vpop.f32.mrf.mxu0
  %v462 = vadd.f32 %v448, %v461
  %463 = vdwg.mxu0
  %464 = vmatpush.bf16.msra.mxu0 %v332
  %465 = vmatpush.bf16.msra.mxu0 %v329
  %466 = vmatpush.bf16.msra.mxu0 %v326
  %467 = vmatpush.bf16.msra.mxu0 %v323
  %468 = vmatpush.bf16.msra.mxu0 %v320
  %469 = vmatpush.bf16.msra.mxu0 %v317
  %470 = vmatpush.bf16.msra.mxu0 %v314
  %471 = vmatpush.bf16.msra.mxu0 %v311
  %472 = vmatmul.bf16.gmra.mxu0 %v125
  %v473 = vpop.f32.mrf.mxu0
  %v474 = vadd.f32 %v113, %v473
  %v475 = vpop.f32.mrf.mxu0
  %v476 = vadd.f32 %v113, %v475
  %477 = vdwg.mxu0
  %478 = vmatpush.bf16.msra.mxu0 %v356
  %479 = vmatpush.bf16.msra.mxu0 %v353
  %480 = vmatpush.bf16.msra.mxu0 %v350
  %481 = vmatpush.bf16.msra.mxu0 %v347
  %482 = vmatpush.bf16.msra.mxu0 %v344
  %483 = vmatpush.bf16.msra.mxu0 %v341
  %484 = vmatpush.bf16.msra.mxu0 %v338
  %485 = vmatpush.bf16.msra.mxu0 %v335
  %486 = vmatmul.bf16.gmra.mxu0 %v126
  %v487 = vpop.f32.mrf.mxu0
  %v488 = vadd.f32 %v474, %v487
  %v489 = vpop.f32.mrf.mxu0
  %v490 = vadd.f32 %v476, %v489
  %491 = vdwg.mxu0
  %492 = vmatpush.bf16.msra.mxu0 0
  %493 = vmatpush.bf16.msra.mxu0 0
  %494 = vmatpush.bf16.msra.mxu0 0
  %495 = vmatpush.bf16.msra.mxu0 0
  %496 = vmatpush.bf16.msra.mxu0 0
  %497 = vmatpush.bf16.msra.mxu0 0
  %498 = vmatpush.bf16.msra.mxu0 %v362
  %499 = vmatpush.bf16.msra.mxu0 %v359
  %500 = vmatmul.bf16.gmra.mxu0 %v420
  %v501 = vpop.f32.mrf.mxu0
  %v502 = vadd.f32 %v488, %v501
  %v503 = vpop.f32.mrf.mxu0
  %v504 = vadd.f32 %v490, %v503
  %505 = vdwg.mxu0
  %506 = vmatpush.bf16.msra.mxu0 %v333
  %507 = vmatpush.bf16.msra.mxu0 %v330
  %508 = vmatpush.bf16.msra.mxu0 %v327
  %509 = vmatpush.bf16.msra.mxu0 %v324
  %510 = vmatpush.bf16.msra.mxu0 %v321
  %511 = vmatpush.bf16.msra.mxu0 %v318
  %512 = vmatpush.bf16.msra.mxu0 %v315
  %513 = vmatpush.bf16.msra.mxu0 %v312
  %514 = vmatmul.bf16.gmra.mxu0 %v125
  %v515 = vpop.f32.mrf.mxu0
  %v516 = vadd.f32 %v114, %v515
  %v517 = vpop.f32.mrf.mxu0
  %v518 = vadd.f32 %v114, %v517
  %519 = vdwg.mxu0
  %520 = vmatpush.bf16.msra.mxu0 %v357
  %521 = vmatpush.bf16.msra.mxu0 %v354
  %522 = vmatpush.bf16.msra.mxu0 %v351
  %523 = vmatpush.bf16.msra.mxu0 %v348
  %524 = vmatpush.bf16.msra.mxu0 %v345
  %525 = vmatpush.bf16.msra.mxu0 %v342
  %526 = vmatpush.bf16.msra.mxu0 %v339
  %527 = vmatpush.bf16.msra.mxu0 %v336
  %528 = vmatmul.bf16.gmra.mxu0 %v126
  %v529 = vpop.f32.mrf.mxu0
  %v530 = vadd.f32 %v516, %v529
  %v531 = vpop.f32.mrf.mxu0
  %v532 = vadd.f32 %v518, %v531
  %533 = vdwg.mxu0
  %534 = vmatpush.bf16.msra.mxu0 0
  %535 = vmatpush.bf16.msra.mxu0 0
  %536 = vmatpush.bf16.msra.mxu0 0
  %537 = vmatpush.bf16.msra.mxu0 0
  %538 = vmatpush.bf16.msra.mxu0 0
  %539 = vmatpush.bf16.msra.mxu0 0
  %540 = vmatpush.bf16.msra.mxu0 %v363
  %541 = vmatpush.bf16.msra.mxu0 %v360
  %542 = vmatmul.bf16.gmra.mxu0 %v420
  %v543 = vpop.f32.mrf.mxu0
  %v544 = vadd.f32 %v530, %v543
  %v545 = vpop.f32.mrf.mxu0
  %v546 = vadd.f32 %v532, %v545
  %547 = vdwg.mxu0
  %v548 = vmax.f32 %v460, 0.0
  %v549 = vmax.f32 %v502, 0.0
  %v550 = vmax.f32 %v544, 0.0
  %v551 = vmax.f32 %v462, 0.0
  %v552 = vmax.f32 %v504, 0.0
  %v553 = vmax.f32 %v546, 0.0
  %v554 = vmul.f32 %v548, %v101
  %v555 = vmul.f32 %v549, %v102
  %v556 = vmul.f32 %v550, %v103
  %v557 = vmul.f32 %v551, %v104
  %v558 = vmul.f32 %v552, %v105
  %v559 = vmul.f32 %v553, %v106
  %v560 = vld [vmem:[%s2] sm:$0xf]
  %v561 = vld [vmem:[%s2 + $0x4] sm:$0xf]
  %v562 = vld [vmem:[%s2 + $0x8] sm:$0xf]
  %v563 = vld [vmem:[%s2 + $0xc] sm:$0xf]
  %v564 = vld [vmem:[%s2 + $0x10] sm:$0xf]
  %v565 = vld [vmem:[%s2 + $0x14] sm:$0xf]
  %v566 = vld [vmem:[%s2 + $0x18] sm:$0xf]
  %v567 = vld [vmem:[%s2 + $0x1c] sm:$0xf]
  %v568 = vld [vmem:[%s2 + $0x20] sm:$0xf]
  %v569 = vld [vmem:[%s2 + $0x24] sm:$0xf]
  %v570 = vld [vmem:[%s2 + $0x28] sm:$0xf]
  %v571 = vld [vmem:[%s2 + $0x2c] sm:$0xf]
  %v572 = vld [vmem:[%s2 + $0x30] sm:$0xf]
  %v573 = vld [vmem:[%s2 + $0x34] sm:$0xf]
  %v574 = vld [vmem:[%s2 + $0x38] sm:$0xf]
  %v575 = vld [vmem:[%s2 + $0x3c] sm:$0xf]
  %v576 = vld [vmem:[%s2 + $0x40] sm:$0xf]
  %v577 = vld [vmem:[%s2 + $0x44] sm:$0xf]
  %v578 = vld [vmem:[%s2 + $0x48] sm:$0xf]
  %v579 = vld [vmem:[%s2 + $0x4c] sm:$0xf]
  %v580 = vld [vmem:[%s2 + $0x50] sm:$0xf]
  %v581 = vld [vmem:[%s2 + $0x54] sm:$0xf]
  %v582 = vld [vmem:[%s2 + $0x58] sm:$0xf]
  %v583 = vld [vmem:[%s2 + $0x5c] sm:$0xf]
  %v584 = vld [vmem:[%s2 + $0x60] sm:$0xf]
  %v585 = vld [vmem:[%s2 + $0x64] sm:$0xf]
  %v586 = vld [vmem:[%s2 + $0x68] sm:$0xf]
  %v587 = vld [vmem:[%s2 + $0x6c] sm:$0xf]
  %v588 = vld [vmem:[%s2 + $0x70] sm:$0xf]
  %v589 = vld [vmem:[%s2 + $0x74] sm:$0xf]
  %v590 = vld [vmem:[%s2 + $0x78] sm:$0xf]
  %v591 = vld [vmem:[%s2 + $0x7c] sm:$0xf]
  %v592 = vld [vmem:[%s2 + $0x80] sm:$0xf]
  %v593 = vld [vmem:[%s2 + $0x84] sm:$0xf]
  %v594 = vld [vmem:[%s2 + $0x88] sm:$0xf]
  %v595 = vld [vmem:[%s2 + $0x8c] sm:$0xf]
  %v596 = vld [vmem:[%s2 + $0x90] sm:$0xf]
  %v597 = vld [vmem:[%s2 + $0x94] sm:$0xf]
  %v598 = vld [vmem:[%s2 + $0x98] sm:$0xf]
  %v599 = vld [vmem:[%s2 + $0x9c] sm:$0xf]
  %v600 = vld [vmem:[%s2 + $0xa0] sm:$0xf]
  %v601 = vld [vmem:[%s2 + $0xa4] sm:$0xf]
  %v602 = vld [vmem:[%s2 + $0xa8] sm:$0xf]
  %v603 = vld [vmem:[%s2 + $0xac] sm:$0xf]
  %v604 = vld [vmem:[%s2 + $0xb0] sm:$0xf]
  %v605 = vld [vmem:[%s2 + $0xb4] sm:$0xf]
  %v606 = vld [vmem:[%s2 + $0xb8] sm:$0xf]
  %v607 = vld [vmem:[%s2 + $0xbc] sm:$0xf]
  %v608 = vld [vmem:[%s2 + $0xd0] sm:$0x1]
  %v609 = vunpack.c.l.bf16 %v608
  %v610 = vpack.c.bf16 %v557, %v554
  %v611 = vpack.c.bf16 %v558, %v555
  %v612 = vpack.c.bf16 %v559, %v556
  %v613 = vperm.slane %v609, 0
  %v662 = vunpack.c.l.b16 %v560
  %v663 = vunpack.c.l.b16 %v561
  %v664 = vunpack.c.l.b16 %v562
  %v665 = vunpack.c.l.b16 %v563
  %v666 = vunpack.c.l.b16 %v564
  %v667 = vunpack.c.l.b16 %v565
  %v668 = vunpack.c.l.b16 %v566
  %v669 = vunpack.c.l.b16 %v567
  %v670 = vunpack.c.l.b16 %v568
  %v671 = vunpack.c.l.b16 %v569
  %v672 = vunpack.c.l.b16 %v570
  %v673 = vunpack.c.l.b16 %v571
  %v674 = vunpack.c.l.b16 %v572
  %v675 = vunpack.c.l.b16 %v573
  %v676 = vunpack.c.l.b16 %v574
  %v677 = vunpack.c.l.b16 %v575
  %v678 = vunpack.c.l.b16 %v576
  %v679 = vunpack.c.l.b16 %v577
  %v680 = vunpack.c.l.b16 %v578
  %v681 = vunpack.c.l.b16 %v579
  %v682 = vunpack.c.l.b16 %v580
  %v683 = vunpack.c.l.b16 %v581
  %v684 = vunpack.c.l.b16 %v582
  %v685 = vunpack.c.l.b16 %v583
  %v686 = vunpack.c.l.b16 %v584
  %v687 = vunpack.c.l.b16 %v585
  %v688 = vunpack.c.l.b16 %v586
  %v689 = vunpack.c.l.b16 %v587
  %v690 = vunpack.c.l.b16 %v588
  %v691 = vunpack.c.l.b16 %v589
  %v692 = vunpack.c.l.b16 %v590
  %v693 = vunpack.c.l.b16 %v591
  %v694 = vunpack.c.l.b16 %v592
  %v695 = vunpack.c.l.b16 %v593
  %v696 = vunpack.c.l.b16 %v594
  %v697 = vunpack.c.l.b16 %v595
  %v698 = vunpack.c.l.b16 %v596
  %v699 = vunpack.c.l.b16 %v597
  %v700 = vunpack.c.l.b16 %v598
  %v701 = vunpack.c.l.b16 %v599
  %v702 = vunpack.c.l.b16 %v600
  %v703 = vunpack.c.l.b16 %v601
  %v704 = vunpack.c.l.b16 %v602
  %v705 = vunpack.c.l.b16 %v603
  %v706 = vunpack.c.l.b16 %v604
  %v707 = vunpack.c.l.b16 %v605
  %v708 = vunpack.c.l.b16 %v606
  %v709 = vunpack.c.l.b16 %v607
  %v710 = vpack.c.b16 %v663, %v662
  %v711 = vpack.c.b16 %v665, %v664
  %v712 = vpack.c.b16 %v667, %v666
  %v713 = vpack.c.b16 %v669, %v668
  %v714 = vpack.c.b16 %v671, %v670
  %v715 = vpack.c.b16 %v673, %v672
  %v716 = vpack.c.b16 %v675, %v674
  %v717 = vpack.c.b16 %v677, %v676
  %v718 = vpack.c.b16 %v679, %v678
  %v719 = vpack.c.b16 %v681, %v680
  %v720 = vpack.c.b16 %v683, %v682
  %v721 = vpack.c.b16 %v685, %v684
  %v722 = vpack.c.b16 %v687, %v686
  %v723 = vpack.c.b16 %v689, %v688
  %v724 = vpack.c.b16 %v691, %v690
  %v725 = vpack.c.b16 %v693, %v692
  %v726 = vpack.c.b16 %v695, %v694
  %v727 = vpack.c.b16 %v697, %v696
  %v728 = vpack.c.b16 %v699, %v698
  %v729 = vpack.c.b16 %v701, %v700
  %v730 = vpack.c.b16 %v703, %v702
  %v731 = vpack.c.b16 %v705, %v704
  %v732 = vpack.c.b16 %v707, %v706
  %v733 = vpack.c.b16 %v709, %v708
  %758 = vmatpush.bf16.msra.mxu0 %v717
  %759 = vmatpush.bf16.msra.mxu0 %v716
  %760 = vmatpush.bf16.msra.mxu0 %v715
  %761 = vmatpush.bf16.msra.mxu0 %v714
  %762 = vmatpush.bf16.msra.mxu0 %v713
  %763 = vmatpush.bf16.msra.mxu0 %v712
  %764 = vmatpush.bf16.msra.mxu0 %v711
  %765 = vmatpush.bf16.msra.mxu0 %v710
  %766 = vmatmul.bf16.gmra.mxu0 %v610
  %v767 = vpop.f32.mrf.mxu0
  %v768 = vadd.f32 %v613, %v767
  %v769 = vpop.f32.mrf.mxu0
  %v770 = vadd.f32 %v613, %v769
  %771 = vdwg.mxu0
  %772 = vmatpush.bf16.msra.mxu0 %v725
  %773 = vmatpush.bf16.msra.mxu0 %v724
  %774 = vmatpush.bf16.msra.mxu0 %v723
  %775 = vmatpush.bf16.msra.mxu0 %v722
  %776 = vmatpush.bf16.msra.mxu0 %v721
  %777 = vmatpush.bf16.msra.mxu0 %v720
  %778 = vmatpush.bf16.msra.mxu0 %v719
  %779 = vmatpush.bf16.msra.mxu0 %v718
  %780 = vmatmul.bf16.gmra.mxu0 %v611
  %v781 = vpop.f32.mrf.mxu0
  %v782 = vadd.f32 %v768, %v781
  %v783 = vpop.f32.mrf.mxu0
  %v784 = vadd.f32 %v770, %v783
  %785 = vdwg.mxu0
  %786 = vmatpush.bf16.msra.mxu0 %v733
  %787 = vmatpush.bf16.msra.mxu0 %v732
  %788 = vmatpush.bf16.msra.mxu0 %v731
  %789 = vmatpush.bf16.msra.mxu0 %v730
  %790 = vmatpush.bf16.msra.mxu0 %v729
  %791 = vmatpush.bf16.msra.mxu0 %v728
  %792 = vmatpush.bf16.msra.mxu0 %v727
  %793 = vmatpush.bf16.msra.mxu0 %v726
  %794 = vmatmul.bf16.gmra.mxu0 %v612
  %v795 = vpop.f32.mrf.mxu0
  %v796 = vadd.f32 %v782, %v795
  %v797 = vpop.f32.mrf.mxu0
  %v798 = vadd.f32 %v784, %v797
  %799 = vdwg.mxu0
  %v800 = vmax.f32 %v796, 0.0
  %v801 = vmax.f32 %v798, 0.0
  %v802 = vld [vmem:[%s3] sm:$0xff]
  %v803 = vld [vmem:[%s3 + $0x8] sm:$0xff]
  %v804 = vld [vmem:[%s3 + $0x10] sm:$0xff]
  %v805 = vld [vmem:[%s3 + $0x18] sm:$0xff]
  %v806 = vld [vmem:[%s3 + $0x20] sm:$0xff]
  %v807 = vld [vmem:[%s3 + $0x28] sm:$0xff]
  %v808 = vld [vmem:[%s3 + $0x30] sm:$0xff]
  %v809 = vld [vmem:[%s3 + $0x38] sm:$0xff]
  %v810 = vld [vmem:[%s3 + $0x40] sm:$0xff]
  %v811 = vld [vmem:[%s3 + $0x48] sm:$0xff]
  %v812 = vld [vmem:[%s3 + $0x50] sm:$0xff]
  %v813 = vld [vmem:[%s3 + $0x58] sm:$0xff]
  %v814 = vld [vmem:[%s3 + $0x60] sm:$0xff]
  %v815 = vld [vmem:[%s3 + $0x68] sm:$0xff]
  %v816 = vld [vmem:[%s3 + $0x70] sm:$0xff]
  %v817 = vld [vmem:[%s3 + $0x78] sm:$0xff]
  %v818 = vld [vmem:[%s3 + $0x80] sm:$0xff]
  %v819 = vld [vmem:[%s3 + $0x88] sm:$0xff]
  %v820 = vunpack.c.l.bf16 %v818
  %v821 = vunpack.c.h.bf16 %v818
  %v822 = vunpack.c.l.bf16 %v819
  %v823 = vunpack.c.h.bf16 %v819
  %v824 = vpack.c.bf16 %v801, %v800
  %v841 = vunpack.c.l.b16 %v802
  %v842 = vunpack.c.h.b16 %v802
  %v843 = vunpack.c.l.b16 %v803
  %v844 = vunpack.c.h.b16 %v803
  %v845 = vunpack.c.l.b16 %v804
  %v846 = vunpack.c.h.b16 %v804
  %v847 = vunpack.c.l.b16 %v805
  %v848 = vunpack.c.h.b16 %v805
  %v849 = vunpack.c.l.b16 %v806
  %v850 = vunpack.c.h.b16 %v806
  %v851 = vunpack.c.l.b16 %v807
  %v852 = vunpack.c.h.b16 %v807
  %v853 = vunpack.c.l.b16 %v808
  %v854 = vunpack.c.h.b16 %v808
  %v855 = vunpack.c.l.b16 %v809
  %v856 = vunpack.c.h.b16 %v809
  %v857 = vunpack.c.l.b16 %v810
  %v858 = vunpack.c.h.b16 %v810
  %v859 = vunpack.c.l.b16 %v811
  %v860 = vunpack.c.h.b16 %v811
  %v861 = vunpack.c.l.b16 %v812
  %v862 = vunpack.c.h.b16 %v812
  %v863 = vunpack.c.l.b16 %v813
  %v864 = vunpack.c.h.b16 %v813
  %v865 = vunpack.c.l.b16 %v814
  %v866 = vunpack.c.h.b16 %v814
  %v867 = vunpack.c.l.b16 %v815
  %v868 = vunpack.c.h.b16 %v815
  %v869 = vunpack.c.l.b16 %v816
  %v870 = vunpack.c.h.b16 %v816
  %v871 = vunpack.c.l.b16 %v817
  %v872 = vunpack.c.h.b16 %v817
  %v873 = vpack.c.b16 %v843, %v841
  %v874 = vpack.c.b16 %v844, %v842
  %v875 = vpack.c.b16 %v847, %v845
  %v876 = vpack.c.b16 %v848, %v846
  %v877 = vpack.c.b16 %v851, %v849
  %v878 = vpack.c.b16 %v852, %v850
  %v879 = vpack.c.b16 %v855, %v853
  %v880 = vpack.c.b16 %v856, %v854
  %v881 = vpack.c.b16 %v859, %v857
  %v882 = vpack.c.b16 %v860, %v858
  %v883 = vpack.c.b16 %v863, %v861
  %v884 = vpack.c.b16 %v864, %v862
  %v885 = vpack.c.b16 %v867, %v865
  %v886 = vpack.c.b16 %v868, %v866
  %v887 = vpack.c.b16 %v871, %v869
  %v888 = vpack.c.b16 %v872, %v870
  %905 = vmatpush.bf16.msra.mxu0 %v887
  %906 = vmatpush.bf16.msra.mxu0 %v885
  %907 = vmatpush.bf16.msra.mxu0 %v883
  %908 = vmatpush.bf16.msra.mxu0 %v881
  %909 = vmatpush.bf16.msra.mxu0 %v879
  %910 = vmatpush.bf16.msra.mxu0 %v877
  %911 = vmatpush.bf16.msra.mxu0 %v875
  %912 = vmatpush.bf16.msra.mxu0 %v873
  %913 = vmatmul.bf16.gmra.mxu0 %v824
  %v914 = vpop.f32.mrf.mxu0
  %v915 = vadd.f32 0.0, %v914
  %v916 = vpop.f32.mrf.mxu0
  %v917 = vadd.f32 0.0, %v916
  %918 = vdwg.mxu0
  %919 = vmatpush.bf16.msra.mxu0 %v888
  %920 = vmatpush.bf16.msra.mxu0 %v886
  %921 = vmatpush.bf16.msra.mxu0 %v884
  %922 = vmatpush.bf16.msra.mxu0 %v882
  %923 = vmatpush.bf16.msra.mxu0 %v880
  %924 = vmatpush.bf16.msra.mxu0 %v878
  %925 = vmatpush.bf16.msra.mxu0 %v876
  %926 = vmatpush.bf16.msra.mxu0 %v874
  %927 = vmatmul.bf16.gmra.mxu0 %v824
  %v928 = vpop.f32.mrf.mxu0
  %v929 = vadd.f32 0.0, %v928
  %v930 = vpop.f32.mrf.mxu0
  %v931 = vadd.f32 0.0, %v930
  %932 = vdwg.mxu0
  %v933 = vmul.f32 %v915, %v820
  %v934 = vmul.f32 %v929, %v821
  %v935 = vmul.f32 %v917, %v822
  %v936 = vmul.f32 %v931, %v823
  %v937 = vld [vmem:[%s4] sm:$0xf]
  %v938 = vld [vmem:[%s4 + $0x4] sm:$0xf]
  %v939 = vld [vmem:[%s4 + $0x8] sm:$0xf]
  %v940 = vld [vmem:[%s4 + $0xc] sm:$0xf]
  %v941 = vld [vmem:[%s4 + $0x10] sm:$0xf]
  %v942 = vld [vmem:[%s4 + $0x14] sm:$0xf]
  %v943 = vld [vmem:[%s4 + $0x18] sm:$0xf]
  %v944 = vld [vmem:[%s4 + $0x1c] sm:$0xf]
  %v945 = vld [vmem:[%s4 + $0x20] sm:$0xf]
  %v946 = vld [vmem:[%s4 + $0x24] sm:$0xf]
  %v947 = vld [vmem:[%s4 + $0x28] sm:$0xf]
  %v948 = vld [vmem:[%s4 + $0x2c] sm:$0xf]
  %v949 = vld [vmem:[%s4 + $0x30] sm:$0xf]
  %v950 = vld [vmem:[%s4 + $0x34] sm:$0xf]
  %v951 = vld [vmem:[%s4 + $0x38] sm:$0xf]
  %v952 = vld [vmem:[%s4 + $0x3c] sm:$0xf]
  %v953 = vld [vmem:[%s4 + $0x40] sm:$0xf]
  %v954 = vld [vmem:[%s4 + $0x44] sm:$0xf]
  %v955 = vld [vmem:[%s4 + $0x48] sm:$0xf]
  %v956 = vld [vmem:[%s4 + $0x4c] sm:$0xf]
  %v957 = vld [vmem:[%s4 + $0x50] sm:$0xf]
  %v958 = vld [vmem:[%s4 + $0x54] sm:$0xf]
  %v959 = vld [vmem:[%s4 + $0x58] sm:$0xf]
  %v960 = vld [vmem:[%s4 + $0x5c] sm:$0xf]
  %v961 = vld [vmem:[%s4 + $0x60] sm:$0xf]
  %v962 = vld [vmem:[%s4 + $0x64] sm:$0xf]
  %v963 = vld [vmem:[%s4 + $0x68] sm:$0xf]
  %v964 = vld [vmem:[%s4 + $0x6c] sm:$0xf]
  %v965 = vld [vmem:[%s4 + $0x70] sm:$0xf]
  %v966 = vld [vmem:[%s4 + $0x74] sm:$0xf]
  %v967 = vld [vmem:[%s4 + $0x78] sm:$0xf]
  %v968 = vld [vmem:[%s4 + $0x7c] sm:$0xf]
  %v969 = vunpack.c.l.bf16 %v937
  %v970 = vunpack.c.l.bf16 %v938
  %v971 = vunpack.c.l.bf16 %v939
  %v972 = vunpack.c.l.bf16 %v940
  %v973 = vunpack.c.l.bf16 %v941
  %v974 = vunpack.c.l.bf16 %v942
  %v975 = vunpack.c.l.bf16 %v943
  %v976 = vunpack.c.l.bf16 %v944
  %v977 = vunpack.c.l.bf16 %v945
  %v978 = vunpack.c.l.bf16 %v946
  %v979 = vunpack.c.l.bf16 %v947
  %v980 = vunpack.c.l.bf16 %v948
  %v981 = vunpack.c.l.bf16 %v949
  %v982 = vunpack.c.l.bf16 %v950
  %v983 = vunpack.c.l.bf16 %v951
  %v984 = vunpack.c.l.bf16 %v952
  %v985 = vunpack.c.l.bf16 %v953
  %v986 = vunpack.c.l.bf16 %v954
  %v987 = vunpack.c.l.bf16 %v955
  %v988 = vunpack.c.l.bf16 %v956
  %v989 = vunpack.c.l.bf16 %v957
  %v990 = vunpack.c.l.bf16 %v958
  %v991 = vunpack.c.l.bf16 %v959
  %v992 = vunpack.c.l.bf16 %v960
  %v993 = vunpack.c.l.bf16 %v961
  %v994 = vunpack.c.l.bf16 %v962
  %v995 = vunpack.c.l.bf16 %v963
  %v996 = vunpack.c.l.bf16 %v964
  %v997 = vunpack.c.l.bf16 %v965
  %v998 = vunpack.c.l.bf16 %v966
  %v999 = vunpack.c.l.bf16 %v967
  %v1000 = vunpack.c.l.bf16 %v968
  %v1001 = vld [vmem:[%s4 + $0x80] sm:$0x3]
  %v1002 = vunpack.c.l.bf16 %v1001
  %vm1003 = vcmask 130048
  %v1005 = vsel %vm1003, %v1002, 0
  %1007 = vmatpush.msra.mxu0 0.0
  %1008 = vmatpush.msra.mxu0 0.0
  %1009 = vmatpush.msra.mxu0 0.0
  %1010 = vmatpush.msra.mxu0 0.0
  %1011 = vmatpush.msra.mxu0 0.0
  %1012 = vmatpush.msra.mxu0 0.0
  %1013 = vmatpush.msra.mxu0 0.0
  %1014 = vmatpush.msra.mxu0 0.0
  %1015 = vmatpush.msra.mxu0 0.0
  %1016 = vmatpush.msra.mxu0 0.0
  %1017 = vmatpush.msra.mxu0 0.0
  %1018 = vmatpush.msra.mxu0 0.0
  %1019 = vmatpush.msra.mxu0 0.0
  %1020 = vmatpush.msra.mxu0 0.0
  %1021 = vmatpush.msra.mxu0 %v935
  %1022 = vmatpush.msra.mxu0 %v933
  %1023 = vmatmul.f32.gmra.mxu0 %v1005
  %v1024 = vpop.f32.mrf.mxu0
  %v1025 = vadd.f32 0.0, %v1024
  %1026 = vdwg.mxu0
  %1027 = vmatpush.msra.mxu0 0.0
  %1028 = vmatpush.msra.mxu0 0.0
  %1029 = vmatpush.msra.mxu0 0.0
  %1030 = vmatpush.msra.mxu0 0.0
  %1031 = vmatpush.msra.mxu0 0.0
  %1032 = vmatpush.msra.mxu0 0.0
  %1033 = vmatpush.msra.mxu0 0.0
  %1034 = vmatpush.msra.mxu0 0.0
  %1035 = vmatpush.msra.mxu0 0.0
  %1036 = vmatpush.msra.mxu0 0.0
  %1037 = vmatpush.msra.mxu0 0.0
  %1038 = vmatpush.msra.mxu0 0.0
  %1039 = vmatpush.msra.mxu0 0.0
  %1040 = vmatpush.msra.mxu0 0.0
  %1041 = vmatpush.msra.mxu0 %v936
  %1042 = vmatpush.msra.mxu0 %v934
  %1043 = vmatmul.f32.gmra.mxu0 %v1005
  %v1044 = vpop.f32.mrf.mxu0
  %v1045 = vadd.f32 0.0, %v1044
  %1046 = vdwg.mxu0
  %v1047 = vperm.slane %v1002, 2
  %1048 = vmatpush.msra.mxu0 %v984
  %1049 = vmatpush.msra.mxu0 %v983
  %1050 = vmatpush.msra.mxu0 %v982
  %1051 = vmatpush.msra.mxu0 %v981
  %1052 = vmatpush.msra.mxu0 %v980
  %1053 = vmatpush.msra.mxu0 %v979
  %1054 = vmatpush.msra.mxu0 %v978
  %1055 = vmatpush.msra.mxu0 %v977
  %1056 = vmatpush.msra.mxu0 %v976
  %1057 = vmatpush.msra.mxu0 %v975
  %1058 = vmatpush.msra.mxu0 %v974
  %1059 = vmatpush.msra.mxu0 %v973
  %1060 = vmatpush.msra.mxu0 %v972
  %1061 = vmatpush.msra.mxu0 %v971
  %1062 = vmatpush.msra.mxu0 %v970
  %1063 = vmatpush.msra.mxu0 %v969
  %1064 = vmatmul.f32.gmra.mxu0 %v1025
  %v1065 = vpop.f32.mrf.mxu0
  %v1066 = vadd.f32 %v1047, %v1065
  %1067 = vdwg.mxu0
  %1068 = vmatpush.msra.mxu0 %v1000
  %1069 = vmatpush.msra.mxu0 %v999
  %1070 = vmatpush.msra.mxu0 %v998
  %1071 = vmatpush.msra.mxu0 %v997
  %1072 = vmatpush.msra.mxu0 %v996
  %1073 = vmatpush.msra.mxu0 %v995
  %1074 = vmatpush.msra.mxu0 %v994
  %1075 = vmatpush.msra.mxu0 %v993
  %1076 = vmatpush.msra.mxu0 %v992
  %1077 = vmatpush.msra.mxu0 %v991
  %1078 = vmatpush.msra.mxu0 %v990
  %1079 = vmatpush.msra.mxu0 %v989
  %1080 = vmatpush.msra.mxu0 %v988
  %1081 = vmatpush.msra.mxu0 %v987
  %1082 = vmatpush.msra.mxu0 %v986
  %1083 = vmatpush.msra.mxu0 %v985
  %1084 = vmatmul.f32.gmra.mxu0 %v1045
  %v1085 = vpop.f32.mrf.mxu0
  %v1086 = vadd.f32 %v1066, %v1085
  %1087 = vdwg.mxu0
  %v1088 = vmax.f32 %v1086, 0.0
  %v1089 = vld [vmem:[%s2 + $0xc0] sm:$0xf]
  %v1090 = vld [vmem:[%s2 + $0xc4] sm:$0xf]
  %v1091 = vld [vmem:[%s2 + $0xc8] sm:$0xf]
  %v1092 = vld [vmem:[%s2 + $0xcc] sm:$0xf]
  %v1093 = vunpack.c.l.bf16 %v1089
  %v1094 = vunpack.c.l.bf16 %v1090
  %v1095 = vunpack.c.l.bf16 %v1091
  %v1096 = vunpack.c.l.bf16 %v1092
  %v1097 = vperm.slane %v609, 1
  %v1099 = vsel %vm418, %v1088, 0
  %1101 = vmatpush.msra.mxu0 0.0
  %1102 = vmatpush.msra.mxu0 0.0
  %1103 = vmatpush.msra.mxu0 0.0
  %1104 = vmatpush.msra.mxu0 0.0
  %1105 = vmatpush.msra.mxu0 0.0
  %1106 = vmatpush.msra.mxu0 0.0
  %1107 = vmatpush.msra.mxu0 0.0
  %1108 = vmatpush.msra.mxu0 0.0
  %1109 = vmatpush.msra.mxu0 0.0
  %1110 = vmatpush.msra.mxu0 0.0
  %1111 = vmatpush.msra.mxu0 0.0
  %1112 = vmatpush.msra.mxu0 0.0
  %1113 = vmatpush.msra.mxu0 %v1096
  %1114 = vmatpush.msra.mxu0 %v1095
  %1115 = vmatpush.msra.mxu0 %v1094
  %1116 = vmatpush.msra.mxu0 %v1093
  %1117 = vmatmul.f32.gmra.mxu0 %v1099
  %v1118 = vpop.f32.mrf.mxu0
  %v1119 = vadd.f32 %v1097, %v1118
  %1120 = vdwg.mxu0
  %1121 = vst [vmem:[%s5] sm:$0x3] %v1119
  // Predicated region
  $region22: #{gradcam_forward.1} parent=0 // pred_check
    _
  $region23: #{gradcam_forward.1} parent=0 // pred_check_branch
    %1123 = sbr.rel (0) target = $region25
  $region24: #{gradcam_forward.1} parent=0 // pred_region
    _
  $region25: #{gradcam_forward.1} parent=0 // pred_fallthru
    _
  // Predicated region
  $region26: #{gradcam_forward.1} parent=0 // pred_check
    _
  $region27: #{gradcam_forward.1} parent=0 // pred_check_branch
    %1125 = sbr.rel (0) target = $region29
  $region28: #{gradcam_forward.1} parent=0 // pred_region
    _
  $region29: #{gradcam_forward.1} parent=0 // pred_fallthru
    _

</llo_original>
